<compile_context>
chip_gen: v5e
topology: v5e:2x2
jax: 0.10.0
libtpu: 0.0.40
codegen_flags: <defaults>
</compile_context>

<pallas_src>
import jax
import jax.numpy as jnp
from jax.experimental import pallas as pl
from jax.experimental.pallas import tpu as pltpu


# --------------------------------------------------------------------------
# Kernel: one (1, TN, K) patch tile @ (K, E) weight -> (1, TN, E) embeddings
# --------------------------------------------------------------------------
def patch_embed_kernel(p_ref, w_ref, o_ref):
    # MXU matmul, f32 accumulation; cast back to the output storage dtype.
    o_ref[0] = jnp.dot(
        p_ref[0], w_ref[...], preferred_element_type=jnp.float32
    ).astype(o_ref.dtype)


# --------------------------------------------------------------------------
# Wrapper
# --------------------------------------------------------------------------
def _pick_token_tile(num_patches):
    # Prefer large, MXU/lane-friendly token tiles; fall back to the full
    # extent (always legal: block dim == full array dim).
    for tn in (256, 128):
        if num_patches % tn == 0:
            return tn
    return num_patches


def patch_embed_forward(x, conv_weight, patch_size):
    """x: (B, C, H, W); conv_weight: (E, C, P, P) (torch Conv2d layout)."""
    B, C, H, W = x.shape
    P = patch_size
    E = conv_weight.shape[0]
    Gh, Gw = H // P, W // P
    Np = Gh * Gw
    K = C * P * P

    # im2col: (B, C, Gh, P, Gw, P) -> (B, Gh, Gw, C, P, P) -> (B, Np, K)
    # Patch-vector ordering (c, ph, pw) matches conv_weight.reshape(E, C*P*P).
    patches = (
        x.reshape(B, C, Gh, P, Gw, P)
        .transpose(0, 2, 4, 1, 3, 5)
        .reshape(B, Np, K)
    )
    w_mat = conv_weight.reshape(E, K).T  # (K, E): y = patches @ w_mat

    TN = _pick_token_tile(Np)
    grid = (B, Np // TN)

    out = pl.pallas_call(
        patch_embed_kernel,
        out_shape=jax.ShapeDtypeStruct((B, Np, E), x.dtype),
        grid=grid,
        in_specs=[
            pl.BlockSpec((1, TN, K), lambda b, t: (b, t, 0)),
            # Constant index_map: weight stays resident, no re-DMA per step.
            pl.BlockSpec((K, E), lambda b, t: (0, 0)),
        ],
        out_specs=pl.BlockSpec((1, TN, E), lambda b, t: (b, t, 0)),
        compiler_params=pltpu.CompilerParams(
            dimension_semantics=("parallel", "parallel"),
        ),
    )(patches, w_mat)
    return out


# --------------------------------------------------------------------------
# Pure-JAX reference (real strided conv) for a correctness check
# --------------------------------------------------------------------------
def patch_embed_reference(x, conv_weight, patch_size):
    y = jax.lax.conv_general_dilated(
        x,
        conv_weight,
        window_strides=(patch_size, patch_size),
        padding="VALID",
        dimension_numbers=("NCHW", "OIHW", "NCHW"),
    )  # (B, E, Gh, Gw)
    B, E, Gh, Gw = y.shape
    return y.reshape(B, E, Gh * Gw).transpose(0, 2, 1)  # (B, Np, E)


# --------------------------------------------------------------------------
if __name__ == "__main__":
    # Small shapes consistent with the module: 16x16 image, 4x4 patches,
    # 3 input channels, 128-dim embedding (lane-dense output).
    B, C, H, W = 2, 3, 16, 16
    P = 4
    E = 128

    key = jax.random.PRNGKey(0)
    kx, kw = jax.random.split(key, 2)

    x = jax.random.normal(kx, (B, C, H, W), dtype=jnp.float32)
    conv_weight = 0.02 * jax.random.normal(kw, (E, C, P, P), dtype=jnp.float32)

    out = patch_embed_forward(x, conv_weight, P)
    out = jax.block_until_ready(out)

    ref = patch_embed_reference(x, conv_weight, P)
    num_patches = (H // P) * (W // P)
    assert out.shape == (B, num_patches, E), out.shape
    max_err = float(jnp.max(jnp.abs(out - ref)))
    assert max_err < 1e-4, f"mismatch vs reference: {max_err}"

    print("KERNEL_OK")
</pallas_src>

<mosaic_0001>
module attributes {stable_mosaic.version = 11 : i64} {
  func.func @patch_embed_kernel(%arg0: i32, %arg1: i32, %arg2: memref<1x16x48xf32, #tpu.memory_space<vmem>>, %arg3: memref<48x128xf32, #tpu.memory_space<vmem>>, %arg4: memref<1x16x128xf32, #tpu.memory_space<vmem>>) attributes {dimension_semantics = [#tpu.dimension_semantics<parallel>, #tpu.dimension_semantics<parallel>], iteration_bounds = array<i64: 2, 1>, scalar_prefetch = 0 : i64, scratch_operands = 0 : i64, tpu.core_type = #tpu.core_type<tc>, window_params = [{transform_indices = @transform_0, window_bounds = array<i64: 1, 16, 48>}, {pipeline_mode = #tpu.pipeline_mode<synchronous>, transform_indices = @transform_1, window_bounds = array<i64: 48, 128>}, {transform_indices = @transform_2, window_bounds = array<i64: 1, 16, 128>}]} {
    %c0 = arith.constant 0 : index
    %c0_0 = arith.constant 0 : index
    %c0_1 = arith.constant 0 : index
    %0 = vector.load %arg2[%c0, %c0_0, %c0_1] : memref<1x16x48xf32, #tpu.memory_space<vmem>>, vector<1x16x48xf32>
    %1 = vector.shape_cast %0 : vector<1x16x48xf32> to vector<16x48xf32>
    %c0_2 = arith.constant 0 : index
    %c0_3 = arith.constant 0 : index
    %2 = vector.load %arg3[%c0_2, %c0_3] : memref<48x128xf32, #tpu.memory_space<vmem>>, vector<48x128xf32>
    %cst = arith.constant dense<0.000000e+00> : vector<16x128xf32>
    %3 = tpu.matmul %1, %2, %cst {dimension_numbers = #tpu.dot_dimension_numbers<[1], [0], [0], [1], [0, 0, 1, 1], [], []>} : vector<16x48xf32>, vector<48x128xf32>, vector<16x128xf32> -> vector<16x128xf32>
    %c0_4 = arith.constant 0 : index
    %c0_5 = arith.constant 0 : index
    %c0_6 = arith.constant 0 : index
    %4 = vector.load %arg4[%c0_4, %c0_5, %c0_6] : memref<1x16x128xf32, #tpu.memory_space<vmem>>, vector<1x16x128xf32>
    %5 = vector.shape_cast %4 : vector<1x16x128xf32> to vector<16x128xf32>
    %6 = vector.shape_cast %3 : vector<16x128xf32> to vector<1x16x128xf32>
    tpu.vector_store %arg4[%c0_4, %c0_5, %c0_6], %6 {strides = array<i32>} : memref<1x16x128xf32, #tpu.memory_space<vmem>>, vector<1x16x128xf32>,
    return
  }
  func.func @transform_0(%arg0: i32, %arg1: i32) -> (i32, i32, i32) {
    %c0_i32 = arith.constant 0 : i32
    %c0_i32_0 = arith.constant 0 : i32
    return %arg0, %arg1, %c0_i32 : i32, i32, i32
  }
  func.func @transform_1(%arg0: i32, %arg1: i32) -> (i32, i32) {
    %c0_i32 = arith.constant 0 : i32
    %c0_i32_0 = arith.constant 0 : i32
    %c0_i32_1 = arith.constant 0 : i32
    return %c0_i32, %c0_i32_0 : i32, i32
  }
  func.func @transform_2(%arg0: i32, %arg1: i32) -> (i32, i32, i32) {
    %c0_i32 = arith.constant 0 : i32
    %c0_i32_0 = arith.constant 0 : i32
    return %arg0, %arg1, %c0_i32 : i32, i32, i32
  }
}

</mosaic_0001>

<llo_original>
// kernel: tpu_custom_call.1
$region0: #{tpu_custom_call.1}
  #allocation0 [shape = 'u32[]', space=smem, size = 0x4, offset = 0x4, fixed_abs, tag = 'smem constant byte address 0x4 - core index']
  #allocation1 [shape = 'u32[72,128]{1,0:T(1,128)}', space=vmem, size = 0x9000, scoped, tag = 'internal scratch']
  %s0 = inlined_call_operand.hbm [shape: f32[2,16,48], index: 0, kind: input, shape index: {}]
  %s1 = inlined_call_operand.hbm [shape: f32[48,128], index: 1, kind: input, shape index: {}]
  %s2 = inlined_call_operand.hbm [shape: f32[2,16,128], index: 2, kind: output, shape index: {}]
  %s3 = sld [smem:[#allocation0]]
  $region49: #{tpu_custom_call.1} parent=0
    _
  %s5 = ssub.s32 1, %s3
  %s6 = scalar_select 0, %s5, %s3
  $region1: #{tpu_custom_call.1} parent=0
    #allocation2 [shape = 'u8[16384]{0}', space=vmem, size = 0x4000, scoped, tag = 'input window, operand 0']
    #allocation3 [shape = 's32[2]{0}', space=sflag, size = 0x8, scoped, tag = 'scoped memory for tpu_custom_call.1']
    #allocation4 [shape = 's32[2]{0}', space=sflag, size = 0x8, scoped, tag = 'scoped memory for tpu_custom_call.1']
    #allocation5 [shape = 'u8[24576]{0}', space=vmem, size = 0x6000, scoped, tag = 'input window, operand 1, single buffered']
    #allocation6 [shape = 's32[1]{0}', space=sflag, size = 0x4, scoped, tag = 'scoped memory for tpu_custom_call.1']
    #allocation7 [shape = 'u8[16384]{0}', space=vmem, size = 0x4000, scoped, tag = 'output window, operand 0']
    %7 = vsyncpa [#allocation3], 0
    %s8 = scalar_lea.sflag [#allocation3], 1
    %9 = vsyncpa %s8, 0
    %10 = vsyncpa [#allocation6], 0
    %11 = vsyncpa [#allocation4], 0
    %s12 = scalar_lea.sflag [#allocation4], 1
    %13 = vsyncpa %s12, 0
    loop: start=0, step=1, limit=4
    $region2: #{tpu_custom_call.1} parent=1 // loop_pre_header
      _
    $region3: #{tpu_custom_call.1} parent=1 // loop_header
      %s15 = sphi 0, %s19
      %p16 = scmp.ge.s32.totalorder %s15, 4
      %s22 = sphi 0, %s34
      %s23 = sphi 0, %s30
      %s24 = sphi 0, %s22
      %s25 = sphi 0, %s23
      %s26 = sphi 0, %s24
      %s27 = sphi 0, %s25
      %s39 = sphi 0, %s41
      %s42 = sphi 0, %s39
      %s43 = sphi 0, %s42
      %s59 = sphi 0, %s43
      %s63 = sphi 0, %s63
      %s65 = sphi 0, %s63
      %s66 = sphi 0, %s65
      %s80 = sphi 0, %s66
      %s88 = sphi 0, %s90
      %s91 = sphi 0, %s88
      %s92 = sphi 0, %s91
      %s108 = sphi 0, %s92
    $region4: #{tpu_custom_call.1} parent=1 // loop_header_branch
      %18 = sbr.rel (%p16) target = $region8
    $region5: #{tpu_custom_call.1} parent=1 // loop_body
      %s20 = ssub.s32 %s15, 1
      %s21 = ssub.s32 %s15, 2
      %s28 = sadd.s32 1, %s23
      %p29 = scmp.ge.s32.totalorder %s28, 1
      %s30 = scalar_select %p29, 0, %s28
      %s31 = sadd.s32 1, %s22
      %s32 = scalar_select %p29, %s31, %s22
      %p33 = scmp.ge.s32.totalorder %s32, 2
      %s34 = scalar_select %p33, 0, %s32
      %s35 = ssub.s32 %s22, %s34
      %s36 = ssub.s32 %s23, %s30
      %s37 = sor.u32 %s35, %s36
      %p38 = scmp.eq.s32.totalorder %s37, 0
      %s40 = sadd.s32 %s39, 1
      %s41 = scalar_select %p38, %s39, %s40
      %p44 = pneg %p38
      %p45 = scmp.eq.s32.totalorder %s15, 1
      %p46 = por %p44, %p45
      %p47 = scmp.ne.s32.totalorder %s39, %s42
      %p48 = scmp.eq.s32.totalorder %s15, 0
      %p49 = por %p47, %p48
      %p50 = scmp.ne.s32.totalorder %s39, %s42
      %p51 = scmp.eq.s32.totalorder %s20, 1
      %p52 = por %p50, %p51
      %p53 = scmp.ne.s32.totalorder %s42, %s43
      %p54 = scmp.eq.s32.totalorder %s20, 0
      %p55 = por %p53, %p54
      %p56 = scmp.ne.s32.totalorder %s42, %s43
      %p57 = scmp.eq.s32.totalorder %s21, 1
      %p58 = por %p56, %p57
      %p60 = scmp.ne.s32.totalorder %s43, %s59
      %p61 = scmp.eq.s32.totalorder %s21, 0
      %p62 = por %p60, %p61
      %s64 = sadd.s32 %s63, 1
      %p67 = scmp.eq.s32.totalorder %s15, 1
      %p68 = scmp.ne.s32.totalorder %s63, %s65
      %p69 = scmp.eq.s32.totalorder %s15, 0
      %p70 = por %p68, %p69
      %p71 = scmp.ne.s32.totalorder %s63, %s65
      %p72 = scmp.eq.s32.totalorder %s20, 1
      %p73 = por %p71, %p72
      %p74 = scmp.ne.s32.totalorder %s65, %s66
      %p75 = scmp.eq.s32.totalorder %s20, 0
      %p76 = por %p74, %p75
      %p77 = scmp.ne.s32.totalorder %s65, %s66
      %p78 = scmp.eq.s32.totalorder %s21, 1
      %p79 = por %p77, %p78
      %p81 = scmp.ne.s32.totalorder %s66, %s80
      %p82 = scmp.eq.s32.totalorder %s21, 0
      %p83 = por %p81, %p82
      %s84 = ssub.s32 %s22, %s34
      %s85 = ssub.s32 %s23, %s30
      %s86 = sor.u32 %s84, %s85
      %p87 = scmp.eq.s32.totalorder %s86, 0
      %s89 = sadd.s32 %s88, 1
      %s90 = scalar_select %p87, %s88, %s89
      %p93 = pneg %p87
      %p94 = scmp.eq.s32.totalorder %s15, 1
      %p95 = por %p93, %p94
      %p96 = scmp.ne.s32.totalorder %s88, %s91
      %p97 = scmp.eq.s32.totalorder %s15, 0
      %p98 = por %p96, %p97
      %p99 = scmp.ne.s32.totalorder %s88, %s91
      %p100 = scmp.eq.s32.totalorder %s20, 1
      %p101 = por %p99, %p100
      %p102 = scmp.ne.s32.totalorder %s91, %s92
      %p103 = scmp.eq.s32.totalorder %s20, 0
      %p104 = por %p102, %p103
      %p105 = scmp.ne.s32.totalorder %s91, %s92
      %p106 = scmp.eq.s32.totalorder %s21, 1
      %p107 = por %p105, %p106
      %p109 = scmp.ne.s32.totalorder %s92, %s108
      %p110 = scmp.eq.s32.totalorder %s21, 0
      %p111 = por %p109, %p110
      %p112 = scmp.le.s32.totalorder 1, %s15
      %p113 = scmp.lt.s32.totalorder %s15, 3
      %p114 = pnand %p112, %p113
      %p115 = pneg %p114
      // Predicated region
      $region9: #{tpu_custom_call.1} parent=5 // pred_check
        _
      $region10: #{tpu_custom_call.1} parent=5 // pred_check_branch
        %117 = sbr.rel (%p114) target = $region12
      $region11: #{tpu_custom_call.1} parent=5 // pred_region
        %s118 = ssub.s32 %s15, 1
        // Predicated region
        $region13: #{tpu_custom_call.1} parent=11 // pred_check
          %p119 = pneg %p76
        $region14: #{tpu_custom_call.1} parent=11 // pred_check_branch
          %121 = sbr.rel (%p119) target = $region16
        $region15: #{tpu_custom_call.1} parent=11 // pred_region
          %123 = vsyncadd [#allocation6], 0
          %s124 = sshll.u32 %s1, 4
          %s125 = int_to_ptr.hbm [resolvable:$true] %s124
          %s126 = sshll.u32 [#allocation5], 4
          %s127 = int_to_ptr.vmem [resolvable:$true] %s126
          %132 = dma.hbm_to_vmem [thread:$0]  %s125, 768, %s127, [#allocation6], 128, 128, 8
        $region16: #{tpu_custom_call.1} parent=11 // pred_fallthru
          _
      $region12: #{tpu_custom_call.1} parent=5 // pred_fallthru
        _
      %p133 = scmp.lt.s32.totalorder %s15, 2
      // Predicated region
      $region17: #{tpu_custom_call.1} parent=5 // pred_check
        %p134 = pneg %p133
      $region18: #{tpu_custom_call.1} parent=5 // pred_check_branch
        %136 = sbr.rel (%p134) target = $region20
      $region19: #{tpu_custom_call.1} parent=5 // pred_region
        // Predicated region
        $region21: #{tpu_custom_call.1} parent=19 // pred_check
          %p137 = pneg %p49
        $region22: #{tpu_custom_call.1} parent=19 // pred_check_branch
          %139 = sbr.rel (%p137) target = $region24
        $region23: #{tpu_custom_call.1} parent=19 // pred_region
          %s140 = sand.u32 %s39, 1
          %s141 = scalar_lea.sflag [#allocation3], %s140
          %s142 = sand.u32 %s39, 1
          %s143 = smul.addr %s142, 16
          %s144 = scalar_lea.vmem [#allocation2], %s143
          %s145 = smul.u32 2, %s23
          %147 = vsyncadd %s141, 0
          %s148 = smul.addr %s22, 2
          %s149 = sadd.s32 %s145, %s148
          %s150 = smul.addr %s149, 8
          %s151 = scalar_lea.hbm %s0, %s150
          %s152 = sshll.u32 %s151, 4
          %s153 = int_to_ptr.hbm [resolvable:$true] %s152
          %s154 = sshll.u32 %s144, 4
          %s155 = int_to_ptr.vmem [resolvable:$true] %s154
          %160 = dma.hbm_to_vmem [thread:$0]  %s153, 256, %s155, %s141, 128, 128, 8
        $region24: #{tpu_custom_call.1} parent=19 // pred_fallthru
          _
      $region20: #{tpu_custom_call.1} parent=5 // pred_fallthru
        _
      %p161 = scmp.le.s32.totalorder 1, %s15
      %p162 = scmp.lt.s32.totalorder %s15, 3
      %p163 = pnand %p161, %p162
      %p164 = pneg %p163
      // Predicated region
      $region25: #{tpu_custom_call.1} parent=5 // pred_check
        _
      $region26: #{tpu_custom_call.1} parent=5 // pred_check_branch
        %166 = sbr.rel (%p163) target = $region28
      $region27: #{tpu_custom_call.1} parent=5 // pred_region
        %s167 = ssub.s32 %s15, 1
        %s168 = sand.u32 %s42, 1
        %s169 = scalar_lea.sflag [#allocation3], %s168
        %s170 = sand.u32 %s42, 1
        %s171 = smul.addr %s170, 16
        %s172 = scalar_lea.vmem [#allocation2], %s171
        // Predicated region
        $region29: #{tpu_custom_call.1} parent=27 // pred_check
          %p173 = pneg %p55
        $region30: #{tpu_custom_call.1} parent=27 // pred_check_branch
          %175 = sbr.rel (%p173) target = $region32
        $region31: #{tpu_custom_call.1} parent=27 // pred_region
          %177 = dma.done %s169, 256
        $region32: #{tpu_custom_call.1} parent=27 // pred_fallthru
          _
        // Predicated region
        $region33: #{tpu_custom_call.1} parent=27 // pred_check
          %p178 = pneg %p76
        $region34: #{tpu_custom_call.1} parent=27 // pred_check_branch
          %180 = sbr.rel (%p178) target = $region36
        $region35: #{tpu_custom_call.1} parent=27 // pred_region
          %182 = dma.done [#allocation6], 768
        $region36: #{tpu_custom_call.1} parent=27 // pred_fallthru
          _
        %s183 = sand.u32 %s42, 1
        %s184 = scalar_lea.sflag [#allocation3], %s183
        %s185 = sand.u32 %s42, 1
        %s186 = smul.addr %s185, 16
        %s187 = scalar_lea.vmem [#allocation2], %s186
        %p188 = pneg %p55
        %p189 = pneg %p52
        %p190 = pneg %p76
        %p191 = pneg %p73
        %p192 = pneg %p104
        %p193 = pneg %p101
        %s194 = sand.u32 %s91, 1
        %s195 = scalar_lea.sflag [#allocation4], %s194
        %s196 = sand.u32 %s91, 1
        %s197 = smul.addr %s196, 16
        %s198 = scalar_lea.vmem [#allocation7], %s197
        %s199 = smul.u32 2, %s25
        %s200 = smul.u32 2, %s25
        %v201 = vld [vmem:[%s172] sm:$0xff]
        %v202 = vld [vmem:[%s172 + $0x8] sm:$0xff]
        %v203 = vld [vmem:[#allocation5] sm:$0xff]
        %v204 = vld [vmem:[#allocation5 + $0x8] sm:$0xff]
        %v205 = vld [vmem:[#allocation5 + $0x10] sm:$0xff]
        %v206 = vld [vmem:[#allocation5 + $0x18] sm:$0xff]
        %v207 = vld [vmem:[#allocation5 + $0x20] sm:$0xff]
        %v208 = vld [vmem:[#allocation5 + $0x28] sm:$0xff]
        %vm209 = vcmask 392192
        %v211 = vsel %vm209, %v201, 0
        %v214 = vsel %vm209, %v202, 0
        %216 = vmatpush.msra.mxu0 0.0
        %217 = vmatpush.msra.mxu0 0.0
        %218 = vmatpush.msra.mxu0 0.0
        %219 = vmatpush.msra.mxu0 0.0
        %220 = vmatpush.msra.mxu0 0.0
        %221 = vmatpush.msra.mxu0 0.0
        %222 = vmatpush.msra.mxu0 0.0
        %223 = vmatpush.msra.mxu0 0.0
        %224 = vmatpush.msra.mxu0 0.0
        %225 = vmatpush.msra.mxu0 0.0
        %226 = vmatpush.msra.mxu0 %v208
        %227 = vmatpush.msra.mxu0 %v207
        %228 = vmatpush.msra.mxu0 %v206
        %229 = vmatpush.msra.mxu0 %v205
        %230 = vmatpush.msra.mxu0 %v204
        %231 = vmatpush.msra.mxu0 %v203
        %232 = vmatmul.f32.gmra.mxu0 %v211
        %v233 = vpop.f32.mrf.mxu0
        %v234 = vadd.f32 0.0, %v233
        %235 = vmatmul.f32.gmra.mxu0 %v214
        %v236 = vpop.f32.mrf.mxu0
        %v237 = vadd.f32 0.0, %v236
        %238 = vdwg.mxu0
        %239 = vst [vmem:[%s198] sm:$0xff] %v234
        %240 = vst [vmem:[%s198 + $0x8] sm:$0xff] %v237
        %s241 = sand.u32 %s91, 1
        %s242 = scalar_lea.sflag [#allocation4], %s241
        %s243 = sand.u32 %s91, 1
        %s244 = smul.addr %s243, 16
        %s245 = scalar_lea.vmem [#allocation7], %s244
        // Predicated region
        $region37: #{tpu_custom_call.1} parent=27 // pred_check
          %p246 = pneg %p101
        $region38: #{tpu_custom_call.1} parent=27 // pred_check_branch
          %248 = sbr.rel (%p246) target = $region40
        $region39: #{tpu_custom_call.1} parent=27 // pred_region
          %s249 = smul.u32 2, %s25
          %251 = vsyncadd %s242, 0
          %s252 = smul.addr %s24, 2
          %s253 = sadd.s32 %s249, %s252
          %s254 = smul.addr %s253, 8
          %s255 = scalar_lea.hbm %s2, %s254
          %s256 = sshll.u32 %s245, 4
          %s257 = int_to_ptr.vmem [resolvable:$true] %s256
          %s258 = sshll.u32 %s255, 4
          %s259 = int_to_ptr.hbm [resolvable:$true] %s258
          %264 = dma.vmem_to_hbm [thread:$0]  %s257, 256, %s259, %s242, 128, 128, 8
        $region40: #{tpu_custom_call.1} parent=27 // pred_fallthru
          _
      $region28: #{tpu_custom_call.1} parent=5 // pred_fallthru
        _
      %p265 = scmp.le.s32.totalorder 2, %s15
      // Predicated region
      $region41: #{tpu_custom_call.1} parent=5 // pred_check
        %p266 = pneg %p265
      $region42: #{tpu_custom_call.1} parent=5 // pred_check_branch
        %268 = sbr.rel (%p266) target = $region44
      $region43: #{tpu_custom_call.1} parent=5 // pred_region
        %s269 = ssub.s32 %s15, 2
        // Predicated region
        $region45: #{tpu_custom_call.1} parent=43 // pred_check
          %p270 = pneg %p107
        $region46: #{tpu_custom_call.1} parent=43 // pred_check_branch
          %272 = sbr.rel (%p270) target = $region48
        $region47: #{tpu_custom_call.1} parent=43 // pred_region
          %s273 = sand.u32 %s92, 1
          %s274 = scalar_lea.sflag [#allocation4], %s273
          %s275 = sand.u32 %s92, 1
          %s276 = smul.addr %s275, 16
          %s277 = scalar_lea.vmem [#allocation7], %s276
          %279 = dma.done %s274, 256
        $region48: #{tpu_custom_call.1} parent=43 // pred_fallthru
          _
      $region44: #{tpu_custom_call.1} parent=5 // pred_fallthru
        _
    $region6: #{tpu_custom_call.1} parent=1 // loop_footer
      %s19 = sadd.s32 1, %s15
    $region7: #{tpu_custom_call.1} parent=1 // loop_footer_branch
      %14 = sbr.rel target = $region3
    $region8: #{tpu_custom_call.1} parent=1 // loop_exit
      _
    %280 = vsyncpa [#allocation3], 1
    %s281 = scalar_lea.sflag [#allocation3], 1
    %282 = vsyncpa %s281, 1
    %283 = vsyncpa [#allocation6], 1
    %284 = vsyncpa [#allocation4], 1
    %s285 = scalar_lea.sflag [#allocation4], 1
    %286 = vsyncpa %s285, 1

</llo_original>
